<compile_context>
chip_gen: v6e
topology: v6e:2x2x1
jax: 0.10.0
libtpu: 0.0.40
codegen_flags: <defaults>
</compile_context>

<pallas_src>
from functools import partial

import jax
import jax.numpy as jnp
import numpy as np
from jax.experimental import pallas as pl
from jax.experimental.pallas import tpu as pltpu


def _rope_freqs_kernel(t_ref, b_ref, freqs_ref, *, r):
    # t_ref:     (ts, r)       f32  -- r consecutive seq positions per output row
    # b_ref:     (r, r*dim)    f32  -- block-diagonal replicated inv_freq / interp
    # freqs_ref: (ts, r*dim)   f32  -- lane-dense output tile
    #
    # out[i, p*dim + d] = t[i, p] * inv_freq_full[d] / interpolation_factor
    acc = t_ref[:, 0:1] * b_ref[0:1, :]
    for p in range(1, r):                       # r is a small static int -> unrolled
        acc = acc + t_ref[:, p:p + 1] * b_ref[p:p + 1, :]
    freqs_ref[...] = acc


def make_inv_freq(dim, base=4096.0, base_rescale_factor=1.0):
    base = base * base_rescale_factor ** (dim / (dim - 2))
    exponents = jnp.arange(0, dim, 2, dtype=jnp.float32) / dim
    return 1.0 / (base ** exponents)            # (dim//2,) f32


def rotary_embedding_forward(t, inv_freq, interpolation_factor=1.0):
    """Returns (freqs, 1.0) exactly like RotaryEmbedding.forward (use_xpos=False)."""
    assert interpolation_factor >= 1.0
    seq = t.shape[0]
    half = inv_freq.shape[0]
    dim = 2 * half

    # torch.cat((freqs, freqs), -1) hoisted out of the kernel + interp folded in.
    invf_full = (jnp.concatenate([inv_freq, inv_freq]).astype(jnp.float32)
                 / jnp.float32(interpolation_factor))            # (dim,)

    # Lane-packing factor: fold r seq rows into the 128-lane axis when dim < 128.
    if dim < 128 and 128 % dim == 0 and seq % (128 // dim) == 0:
        r = 128 // dim
    else:
        r = 1
    lanes = r * dim
    rows = seq // r

    t2 = t.astype(jnp.float32).reshape(rows, r)                  # (rows, r)
    # Block-diagonal replication matrix: b[p, p*dim + d] = invf_full[d], else 0.
    eye = jnp.eye(r, dtype=jnp.float32)
    b = (eye[:, :, None] * invf_full[None, None, :]).reshape(r, lanes)

    # Tile the (packed) sequence axis; keep VMEM bounded on all generations.
    ts = min(rows, 2048)
    if ts % 8 != 0:          # block 2nd-to-last dim must be a multiple of 8 or full extent
        ts = rows
    grid = (pl.cdiv(rows, ts),)

    out_packed = pl.pallas_call(
        partial(_rope_freqs_kernel, r=r),
        out_shape=jax.ShapeDtypeStruct((rows, lanes), jnp.float32),
        grid=grid,
        in_specs=[
            pl.BlockSpec((ts, r), lambda i: (i, 0)),
            pl.BlockSpec((r, lanes), lambda i: (0, 0)),
        ],
        out_specs=pl.BlockSpec((ts, lanes), lambda i: (i, 0)),
        compiler_params=pltpu.CompilerParams(
            dimension_semantics=("parallel",),
        ),
    )(t2, b)

    freqs = out_packed.reshape(seq, dim)
    return freqs, 1.0


if __name__ == "__main__":
    seq = 8
    dim = 32            # rotary head dim; inv_freq has dim//2 = 16 entries
    interpolation_factor = 1.0

    key = jax.random.PRNGKey(0)
    # Deterministic "positions": integer-like positions with a seeded offset,
    # same as what forward(t) accepts for any float tensor t.
    offset = jax.random.uniform(key, (), minval=0.0, maxval=4.0)
    t = jnp.arange(seq, dtype=jnp.float32) + offset

    inv_freq = make_inv_freq(dim)               # deterministic buffer init

    freqs, scale = rotary_embedding_forward(t, inv_freq, interpolation_factor)
    freqs = jax.block_until_ready(freqs)

    # Pure-JAX reference check of the forward semantics.
    t_ref = t.astype(jnp.float32) / interpolation_factor
    f_ref = jnp.einsum("i,j->ij", t_ref, inv_freq)
    ref = jnp.concatenate([f_ref, f_ref], axis=-1)
    assert freqs.shape == (seq, dim)
    assert freqs.dtype == jnp.float32
    assert scale == 1.0
    np.testing.assert_allclose(np.asarray(freqs), np.asarray(ref), rtol=1e-6, atol=1e-6)

    print("KERNEL_OK")
</pallas_src>

<mosaic_0001>
module attributes {stable_mosaic.version = 11 : i64} {
  func.func @_rope_freqs_kernel(%arg0: i32, %arg1: memref<2x4xf32, #tpu.memory_space<vmem>>, %arg2: memref<4x128xf32, #tpu.memory_space<vmem>>, %arg3: memref<2x128xf32, #tpu.memory_space<vmem>>) attributes {dimension_semantics = [#tpu.dimension_semantics<parallel>], iteration_bounds = array<i64: 1>, scalar_prefetch = 0 : i64, scratch_operands = 0 : i64, tpu.core_type = #tpu.core_type<tc>, window_params = [{transform_indices = @transform_0, window_bounds = array<i64: 2, 4>}, {pipeline_mode = #tpu.pipeline_mode<synchronous>, transform_indices = @transform_1, window_bounds = array<i64: 4, 128>}, {transform_indices = @transform_2, window_bounds = array<i64: 2, 128>}]} {
    %c0 = arith.constant 0 : index
    %c0_0 = arith.constant 0 : index
    %0 = vector.load %arg1[%c0, %c0_0] : memref<2x4xf32, #tpu.memory_space<vmem>>, vector<2x1xf32>
    %c0_1 = arith.constant 0 : index
    %c0_2 = arith.constant 0 : index
    %1 = vector.load %arg2[%c0_1, %c0_2] : memref<4x128xf32, #tpu.memory_space<vmem>>, vector<1x128xf32>
    %2 = vector.broadcast %0 : vector<2x1xf32> to vector<2x128xf32>
    %3 = vector.broadcast %1 : vector<1x128xf32> to vector<2x128xf32>
    %4 = arith.mulf %2, %3 : vector<2x128xf32>
    %c0_3 = arith.constant 0 : index
    %c1 = arith.constant 1 : index
    %5 = vector.load %arg1[%c0_3, %c1] : memref<2x4xf32, #tpu.memory_space<vmem>>, vector<2x1xf32>
    %c1_4 = arith.constant 1 : index
    %c0_5 = arith.constant 0 : index
    %6 = vector.load %arg2[%c1_4, %c0_5] : memref<4x128xf32, #tpu.memory_space<vmem>>, vector<1x128xf32>
    %7 = vector.broadcast %5 : vector<2x1xf32> to vector<2x128xf32>
    %8 = vector.broadcast %6 : vector<1x128xf32> to vector<2x128xf32>
    %9 = arith.mulf %7, %8 : vector<2x128xf32>
    %10 = arith.addf %4, %9 : vector<2x128xf32>
    %c0_6 = arith.constant 0 : index
    %c2 = arith.constant 2 : index
    %11 = vector.load %arg1[%c0_6, %c2] : memref<2x4xf32, #tpu.memory_space<vmem>>, vector<2x1xf32>
    %c2_7 = arith.constant 2 : index
    %c0_8 = arith.constant 0 : index
    %12 = vector.load %arg2[%c2_7, %c0_8] : memref<4x128xf32, #tpu.memory_space<vmem>>, vector<1x128xf32>
    %13 = vector.broadcast %11 : vector<2x1xf32> to vector<2x128xf32>
    %14 = vector.broadcast %12 : vector<1x128xf32> to vector<2x128xf32>
    %15 = arith.mulf %13, %14 : vector<2x128xf32>
    %16 = arith.addf %10, %15 : vector<2x128xf32>
    %c0_9 = arith.constant 0 : index
    %c3 = arith.constant 3 : index
    %17 = vector.load %arg1[%c0_9, %c3] : memref<2x4xf32, #tpu.memory_space<vmem>>, vector<2x1xf32>
    %c3_10 = arith.constant 3 : index
    %c0_11 = arith.constant 0 : index
    %18 = vector.load %arg2[%c3_10, %c0_11] : memref<4x128xf32, #tpu.memory_space<vmem>>, vector<1x128xf32>
    %19 = vector.broadcast %17 : vector<2x1xf32> to vector<2x128xf32>
    %20 = vector.broadcast %18 : vector<1x128xf32> to vector<2x128xf32>
    %21 = arith.mulf %19, %20 : vector<2x128xf32>
    %22 = arith.addf %16, %21 : vector<2x128xf32>
    %c0_12 = arith.constant 0 : index
    %c0_13 = arith.constant 0 : index
    %23 = vector.load %arg3[%c0_12, %c0_13] : memref<2x128xf32, #tpu.memory_space<vmem>>, vector<2x128xf32>
    tpu.vector_store %arg3[%c0_12, %c0_13], %22 {strides = array<i32>} : memref<2x128xf32, #tpu.memory_space<vmem>>, vector<2x128xf32>,
    return
  }
  func.func @transform_0(%arg0: i32) -> (i32, i32) {
    %c0_i32 = arith.constant 0 : i32
    %c0_i32_0 = arith.constant 0 : i32
    return %arg0, %c0_i32 : i32, i32
  }
  func.func @transform_1(%arg0: i32) -> (i32, i32) {
    %c0_i32 = arith.constant 0 : i32
    %c0_i32_0 = arith.constant 0 : i32
    %c0_i32_1 = arith.constant 0 : i32
    return %c0_i32, %c0_i32_0 : i32, i32
  }
  func.func @transform_2(%arg0: i32) -> (i32, i32) {
    %c0_i32 = arith.constant 0 : i32
    %c0_i32_0 = arith.constant 0 : i32
    return %arg0, %c0_i32 : i32, i32
  }
}

</mosaic_0001>

<llo_original>
// kernel: tpu_custom_call.1
$region0: #{tpu_custom_call.1}
  #allocation0 [shape = 'u32[]', space=smem, size = 0x4, offset = 0x4, fixed_abs, tag = 'smem constant byte address 0x4 - core index']
  #allocation1 [shape = 'u32[144,128]{1,0:T(1,128)}', space=vmem, size = 0x12000, scoped, tag = 'internal scratch']
  %s0 = inlined_call_operand.hbm [shape: f32[2,4], index: 0, kind: input, shape index: {}]
  %s1 = inlined_call_operand.hbm [shape: f32[4,128], index: 1, kind: input, shape index: {}]
  %s2 = inlined_call_operand.hbm [shape: f32[2,128], index: 2, kind: output, shape index: {}]
  %s3 = sld [smem:[#allocation0]]
  $region26: #{tpu_custom_call.1} parent=0
    _
  %s5 = ssub.s32 1, %s3
  %s6 = scalar_select 0, %s5, %s3
  $region1: #{tpu_custom_call.1} parent=0
    #allocation2 [shape = 'u8[1024]{0}', space=vmem, size = 0x400, scoped, tag = 'input window, operand 0, single buffered']
    #allocation3 [shape = 's32[1]{0}', space=sflag, size = 0x4, scoped, tag = 'scoped memory for tpu_custom_call.1']
    #allocation4 [shape = 's32[1]{0}', space=sflag, size = 0x4, scoped, tag = 'scoped memory for tpu_custom_call.1']
    #allocation5 [shape = 'u8[2048]{0}', space=vmem, size = 0x800, scoped, tag = 'input window, operand 1, single buffered']
    #allocation6 [shape = 's32[1]{0}', space=sflag, size = 0x4, scoped, tag = 'scoped memory for tpu_custom_call.1']
    #allocation7 [shape = 'u8[1024]{0}', space=vmem, size = 0x400, scoped, tag = 'output window, operand 0, single buffered']
    %7 = vsyncpa [#allocation3], 0
    %8 = vsyncpa [#allocation6], 0
    %9 = vsyncpa [#allocation4], 0
    // Predicated region
    $region2: #{tpu_custom_call.1} parent=1 // pred_check
      _
    $region3: #{tpu_custom_call.1} parent=1 // pred_check_branch
      %11 = sbr.rel (0) target = $region5
    $region4: #{tpu_custom_call.1} parent=1 // pred_region
      %s13 = ssub.s32 32, 32
      %14 = vsyncadd [#allocation3], %s13
      %s16 = sshll.u32 [#allocation2], 4
      %s17 = int_to_ptr.vmem [resolvable:$true] %s16
      %19 = dma.hbm_to_vmem [thread:$0]  %s0, 32, %s17, [#allocation3]
    $region5: #{tpu_custom_call.1} parent=1 // pred_fallthru
      _
    // Predicated region
    $region6: #{tpu_custom_call.1} parent=1 // pred_check
      _
    $region7: #{tpu_custom_call.1} parent=1 // pred_check_branch
      %21 = sbr.rel (0) target = $region9
    $region8: #{tpu_custom_call.1} parent=1 // pred_region
      %s23 = ssub.s32 64, 64
      %24 = vsyncadd [#allocation6], %s23
      %s26 = sshll.u32 [#allocation5], 4
      %s27 = int_to_ptr.vmem [resolvable:$true] %s26
      %29 = dma.hbm_to_vmem [thread:$0]  %s1, 64, %s27, [#allocation6]
    $region9: #{tpu_custom_call.1} parent=1 // pred_fallthru
      _
    // Predicated region
    $region10: #{tpu_custom_call.1} parent=1 // pred_check
      _
    $region11: #{tpu_custom_call.1} parent=1 // pred_check_branch
      %31 = sbr.rel (0) target = $region13
    $region12: #{tpu_custom_call.1} parent=1 // pred_region
      %32 = dma.done [#allocation3], 32
    $region13: #{tpu_custom_call.1} parent=1 // pred_fallthru
      _
    // Predicated region
    $region14: #{tpu_custom_call.1} parent=1 // pred_check
      _
    $region15: #{tpu_custom_call.1} parent=1 // pred_check_branch
      %34 = sbr.rel (0) target = $region17
    $region16: #{tpu_custom_call.1} parent=1 // pred_region
      %35 = dma.done [#allocation6], 64
    $region17: #{tpu_custom_call.1} parent=1 // pred_fallthru
      _
    %v36 = vld [vmem:[#allocation2] sm:$0x3]
    %v37 = vld [vmem:[#allocation5] sm:$0x1]
    %39 = vset.pattern.permute.xlu0 0
    %40 = vperm.xlu0 %39, %v36
    %v41 = vpop.permute.xlu0 %40
    %v43 = vlaneseq
    %v44 = vshrl.u32 %v43, 7
    %v45 = vsub.s32 0, %v44
    %v46 = vrot.slane %v37, %v45
    %v47 = vmul.f32 %v41, %v46
    %v48 = vld [vmem:[#allocation5 + $0x1] sm:$0x1]
    %49 = vset.pattern.permute.xlu0 1
    %50 = vperm.xlu0 %49, %v36
    %v51 = vpop.permute.xlu0 %50
    %v53 = vlaneseq
    %v54 = vshrl.u32 %v53, 7
    %v55 = vsub.s32 0, %v54
    %v56 = vrot.slane %v48, %v55
    %v57 = vmul.f32 %v51, %v56
    %v58 = vadd.f32 %v47, %v57
    %v59 = vld [vmem:[#allocation5 + $0x2] sm:$0x1]
    %60 = vset.pattern.permute.xlu0 2
    %61 = vperm.xlu0 %60, %v36
    %v62 = vpop.permute.xlu0 %61
    %v64 = vlaneseq
    %v65 = vshrl.u32 %v64, 7
    %v66 = vsub.s32 0, %v65
    %v67 = vrot.slane %v59, %v66
    %v68 = vmul.f32 %v62, %v67
    %v69 = vadd.f32 %v58, %v68
    %v70 = vld [vmem:[#allocation5 + $0x3] sm:$0x1]
    %71 = vset.pattern.permute.xlu0 3
    %72 = vperm.xlu0 %71, %v36
    %v73 = vpop.permute.xlu0 %72
    %v75 = vlaneseq
    %v76 = vshrl.u32 %v75, 7
    %v77 = vsub.s32 0, %v76
    %v78 = vrot.slane %v70, %v77
    %v79 = vmul.f32 %v73, %v78
    %v80 = vadd.f32 %v69, %v79
    %81 = vst [vmem:[#allocation7] sm:$0x3] %v80
    // Predicated region
    $region18: #{tpu_custom_call.1} parent=1 // pred_check
      _
    $region19: #{tpu_custom_call.1} parent=1 // pred_check_branch
      %83 = sbr.rel (0) target = $region21
    $region20: #{tpu_custom_call.1} parent=1 // pred_region
      %s85 = ssub.s32 32, 32
      %86 = vsyncadd [#allocation4], %s85
      %s88 = sshll.u32 [#allocation7], 4
      %s89 = int_to_ptr.vmem [resolvable:$true] %s88
      %91 = dma.vmem_to_hbm [thread:$0]  %s89, 32, %s2, [#allocation4]
    $region21: #{tpu_custom_call.1} parent=1 // pred_fallthru
      _
    // Predicated region
    $region22: #{tpu_custom_call.1} parent=1 // pred_check
      _
    $region23: #{tpu_custom_call.1} parent=1 // pred_check_branch
      %93 = sbr.rel (0) target = $region25
    $region24: #{tpu_custom_call.1} parent=1 // pred_region
      %94 = dma.done [#allocation4], 32
    $region25: #{tpu_custom_call.1} parent=1 // pred_fallthru
      _
    %95 = vsyncpa [#allocation3], 1
    %96 = vsyncpa [#allocation6], 1
    %97 = vsyncpa [#allocation4], 1

</llo_original>
